<compile_context>
chip_gen: v6e
topology: v6e:2x2x1
jax: 0.10.0
libtpu: 0.0.40
codegen_flags: <defaults>
</compile_context>

<pallas_src>
import jax
import jax.numpy as jnp
from jax.experimental import pallas as pl
from jax.experimental.pallas import tpu as pltpu


def _round_up(x, m):
    return (x + m - 1) // m * m


def fasttext_kernel(ids_ref, table_ref, w_ref, b_ref, o_ref, acc_ref):
    # ids_ref:   [TB, S]        int32   (batch tile of token ids)
    # table_ref: [TV, E_pad]    bf16    (vocab tile of the embedding table)
    # w_ref:     [E_pad, O_pad] float32 (fc weight, transposed)
    # b_ref:     [1, O_pad]     float32 (fc bias)
    # o_ref:     [TB, O_pad]    float32
    # acc_ref:   [TB, E_pad]    float32 (pooled-embedding accumulator, VMEM scratch)
    v = pl.program_id(1)

    @pl.when(v == 0)
    def _():
        acc_ref[...] = jnp.zeros_like(acc_ref)

    TB, S = ids_ref.shape
    TV = table_ref.shape[0]

    # Normalized bag-of-words for this vocab tile:
    #   counts[b, tv] = (# of s with ids[b, s] == v*TV + tv) / S
    # Built in f32/int32 on the VPU (v5e has no bf16 VPU); cast to bf16 only at the dot.
    ids = ids_ref[...]                                                   # [TB, S]
    vocab = jax.lax.broadcasted_iota(jnp.int32, (TB, S, TV), 2) + v * TV
    match = (ids[:, :, None] == vocab).astype(jnp.float32)               # [TB, S, TV]
    counts = jnp.sum(match, axis=1) * (1.0 / S)                          # [TB, TV]

    acc_ref[...] += jnp.dot(counts.astype(jnp.bfloat16), table_ref[...],
                            preferred_element_type=jnp.float32)          # [TB, E_pad]

    @pl.when(v == pl.num_programs(1) - 1)
    def _():
        o_ref[...] = (jnp.dot(acc_ref[...], w_ref[...],
                              preferred_element_type=jnp.float32)
                      + b_ref[...])                                      # [TB, O_pad]


def fasttext_forward(text_sb, emb_table, fc_w, fc_b):
    """text_sb: [S, B] int token ids (torch convention).
       emb_table: [V, E]; fc_w: [O, E] (torch Linear layout); fc_b: [O]."""
    S, B = text_sb.shape
    V, E = emb_table.shape
    O = fc_w.shape[0]

    # Lane/sublane padding and tile choices.
    E_pad = _round_up(E, 128)
    O_pad = _round_up(O, 128)
    TV = 512 if V >= 512 else _round_up(V, 128)      # vocab (reduction) tile
    V_pad = _round_up(V, TV)
    B_pad = _round_up(B, 8)
    TB = B_pad if B_pad <= 128 else 128              # batch tile
    B_pad = _round_up(B_pad, TB)

    # Token ids: [B_pad, S] int32 (padded batch rows are sliced off at the end).
    ids = jnp.transpose(text_sb, (1, 0)).astype(jnp.int32)
    ids = jnp.pad(ids, ((0, B_pad - B), (0, 0)))

    # Embedding table -> bf16, zero-padded (padding_idx row is already zero upstream).
    table = jnp.pad(emb_table.astype(jnp.float32),
                    ((0, V_pad - V), (0, E_pad - E))).astype(jnp.bfloat16)

    # fc weight transposed to [E_pad, O_pad]; bias to [1, O_pad]; zero-padded.
    w_t = jnp.pad(jnp.transpose(fc_w, (1, 0)).astype(jnp.float32),
                  ((0, E_pad - E), (0, O_pad - O)))
    b2 = jnp.pad(fc_b.astype(jnp.float32).reshape(1, O),
                 ((0, 0), (0, O_pad - O)))

    grid = (B_pad // TB, V_pad // TV)

    flops = 2 * B_pad * V_pad * E_pad + 2 * B_pad * E_pad * O_pad
    bytes_accessed = (ids.size * 4 + table.size * 2 + w_t.size * 4
                      + b2.size * 4 + B_pad * O_pad * 4)

    out = pl.pallas_call(
        fasttext_kernel,
        out_shape=jax.ShapeDtypeStruct((B_pad, O_pad), jnp.float32),
        grid_spec=pltpu.PrefetchScalarGridSpec(
            num_scalar_prefetch=0,
            grid=grid,
            in_specs=[
                pl.BlockSpec((TB, S), lambda b, v: (b, 0)),
                pl.BlockSpec((TV, E_pad), lambda b, v: (v, 0)),
                pl.BlockSpec((E_pad, O_pad), lambda b, v: (0, 0)),
                pl.BlockSpec((1, O_pad), lambda b, v: (0, 0)),
            ],
            out_specs=pl.BlockSpec((TB, O_pad), lambda b, v: (b, 0)),
            scratch_shapes=[pltpu.VMEM((TB, E_pad), jnp.float32)],
        ),
        compiler_params=pltpu.CompilerParams(
            dimension_semantics=("parallel", "arbitrary")),
        cost_estimate=pl.CostEstimate(flops=flops, transcendentals=0,
                                      bytes_accessed=bytes_accessed),
    )(ids, table, w_t, b2)

    return out[:B, :O]


if __name__ == "__main__":
    # Small, module-consistent shapes.
    vocab_size = 64
    embedding_dim = 32
    output_dim = 8
    pad_idx = 0
    seq_len = 8
    batch = 4

    key = jax.random.PRNGKey(0)
    k_emb, k_w, k_b, k_txt = jax.random.split(key, 4)

    # Deterministic parameter init (padding_idx row zeroed, as nn.Embedding does).
    emb_table = jax.random.normal(k_emb, (vocab_size, embedding_dim), jnp.float32)
    emb_table = emb_table.at[pad_idx].set(0.0)
    fc_w = jax.random.normal(k_w, (output_dim, embedding_dim), jnp.float32) * 0.1
    fc_b = jax.random.normal(k_b, (output_dim,), jnp.float32) * 0.1

    # text: [seq_len, batch] int ids (torch convention).
    text = jax.random.randint(k_txt, (seq_len, batch), 0, vocab_size, dtype=jnp.int32)

    out = fasttext_forward(text, emb_table, fc_w, fc_b)
    out = jax.block_until_ready(out)

    # Plain-JAX f32 reference of the same forward pass.
    embedded = jnp.take(emb_table, text, axis=0)           # [S, B, E]
    embedded = jnp.transpose(embedded, (1, 0, 2))           # [B, S, E]
    pooled = jnp.mean(embedded, axis=1)                     # [B, E]
    ref = pooled @ fc_w.T + fc_b                            # [B, O]

    assert out.shape == (batch, output_dim)
    # Tolerance loosened slightly: embedding table is rounded to bf16 for the MXU
    # (accumulation stays f32), which introduces ~1e-3 relative error.
    assert jnp.allclose(out, ref, rtol=2e-2, atol=2e-2), (out, ref)
    print("KERNEL_OK")
</pallas_src>

<mosaic_0001>
module attributes {stable_mosaic.version = 11 : i64} {
  func.func @fasttext_kernel(%arg0: i32, %arg1: i32, %arg2: memref<8x8xi32, #tpu.memory_space<vmem>>, %arg3: memref<128x128xbf16, #tpu.memory_space<vmem>>, %arg4: memref<128x128xf32, #tpu.memory_space<vmem>>, %arg5: memref<1x128xf32, #tpu.memory_space<vmem>>, %arg6: memref<8x128xf32, #tpu.memory_space<vmem>>, %arg7: memref<8x128xf32, #tpu.memory_space<vmem>>) attributes {dimension_semantics = [#tpu.dimension_semantics<parallel>, #tpu.dimension_semantics<arbitrary>], iteration_bounds = array<i64: 1, 1>, scalar_prefetch = 0 : i64, scratch_operands = 1 : i64, tpu.core_type = #tpu.core_type<tc>, window_params = [{transform_indices = @transform_0, window_bounds = array<i64: 8, 8>}, {transform_indices = @transform_1, window_bounds = array<i64: 128, 128>}, {pipeline_mode = #tpu.pipeline_mode<synchronous>, transform_indices = @transform_2, window_bounds = array<i64: 128, 128>}, {pipeline_mode = #tpu.pipeline_mode<synchronous>, transform_indices = @transform_3, window_bounds = array<i64: 1, 128>}, {transform_indices = @transform_4, window_bounds = array<i64: 8, 128>}]} {
    %c0_i32 = arith.constant 0 : i32
    %0 = arith.cmpi eq, %arg1, %c0_i32 : i32
    %1 = arith.extui %0 : i1 to i32
    %c0_i32_0 = arith.constant 0 : i32
    %2 = arith.cmpi ne, %1, %c0_i32_0 : i32
    scf.if %2 {
      %cst_12 = arith.constant 0.000000e+00 : f32
      %25 = vector.broadcast %cst_12 : f32 to vector<8x128xf32>
      %c0_13 = arith.constant 0 : index
      %c0_14 = arith.constant 0 : index
      %26 = vector.load %arg7[%c0_13, %c0_14] : memref<8x128xf32, #tpu.memory_space<vmem>>, vector<8x128xf32>
      tpu.vector_store %arg7[%c0_13, %c0_14], %25 {strides = array<i32>} : memref<8x128xf32, #tpu.memory_space<vmem>>, vector<8x128xf32>,
    } else {
    }
    %c0 = arith.constant 0 : index
    %c0_1 = arith.constant 0 : index
    %3 = vector.load %arg2[%c0, %c0_1] : memref<8x8xi32, #tpu.memory_space<vmem>>, vector<8x8xi32>
    %4 = tpu.iota {dimensions = array<i32: 2>} : vector<8x8x128xi32>
    %c128_i32 = arith.constant 128 : i32
    %5 = arith.muli %arg1, %c128_i32 : i32
    %6 = vector.broadcast %5 : i32 to vector<8x8x128xi32>
    %7 = arith.addi %4, %6 : vector<8x8x128xi32>
    %8 = vector.shape_cast %3 : vector<8x8xi32> to vector<8x8x1xi32>
    %9 = vector.broadcast %8 : vector<8x8x1xi32> to vector<8x8x128xi32>
    %10 = arith.cmpi eq, %9, %7 : vector<8x8x128xi32>
    %11 = arith.extui %10 : vector<8x8x128xi1> to vector<8x8x128xi32>
    %12 = arith.sitofp %11 : vector<8x8x128xi32> to vector<8x8x128xf32>
    %cst = arith.constant dense<0.000000e+00> : vector<8x128xf32>
    %13 = vector.multi_reduction <add>, %12, %cst [1] : vector<8x8x128xf32> to vector<8x128xf32>
    %cst_2 = arith.constant 1.250000e-01 : f32
    %14 = vector.broadcast %cst_2 : f32 to vector<8x128xf32>
    %15 = arith.mulf %13, %14 : vector<8x128xf32>
    %c0_3 = arith.constant 0 : index
    %c0_4 = arith.constant 0 : index
    %16 = vector.load %arg7[%c0_3, %c0_4] : memref<8x128xf32, #tpu.memory_space<vmem>>, vector<8x128xf32>
    %17 = arith.truncf %15 : vector<8x128xf32> to vector<8x128xbf16>
    %c0_5 = arith.constant 0 : index
    %c0_6 = arith.constant 0 : index
    %18 = vector.load %arg3[%c0_5, %c0_6] : memref<128x128xbf16, #tpu.memory_space<vmem>>, vector<128x128xbf16>
    %cst_7 = arith.constant dense<0.000000e+00> : vector<8x128xf32>
    %19 = tpu.matmul %17, %18, %cst_7 {dimension_numbers = #tpu.dot_dimension_numbers<[1], [0], [0], [1], [0, 0, 1, 1], [], []>} : vector<8x128xbf16>, vector<128x128xbf16>, vector<8x128xf32> -> vector<8x128xf32>
    %20 = arith.addf %16, %19 : vector<8x128xf32>
    %c0_8 = arith.constant 0 : index
    %c0_9 = arith.constant 0 : index
    %21 = vector.load %arg7[%c0_8, %c0_9] : memref<8x128xf32, #tpu.memory_space<vmem>>, vector<8x128xf32>
    tpu.vector_store %arg7[%c0_8, %c0_9], %20 {strides = array<i32>} : memref<8x128xf32, #tpu.memory_space<vmem>>, vector<8x128xf32>,
    %c0_i32_10 = arith.constant 0 : i32
    %22 = arith.cmpi eq, %arg1, %c0_i32_10 : i32
    %23 = arith.extui %22 : i1 to i32
    %c0_i32_11 = arith.constant 0 : i32
    %24 = arith.cmpi ne, %23, %c0_i32_11 : i32
    scf.if %24 {
      %c0_12 = arith.constant 0 : index
      %c0_13 = arith.constant 0 : index
      %25 = vector.load %arg7[%c0_12, %c0_13] : memref<8x128xf32, #tpu.memory_space<vmem>>, vector<8x128xf32>
      %c0_14 = arith.constant 0 : index
      %c0_15 = arith.constant 0 : index
      %26 = vector.load %arg4[%c0_14, %c0_15] : memref<128x128xf32, #tpu.memory_space<vmem>>, vector<128x128xf32>
      %cst_16 = arith.constant dense<0.000000e+00> : vector<8x128xf32>
      %27 = tpu.matmul %25, %26, %cst_16 {dimension_numbers = #tpu.dot_dimension_numbers<[1], [0], [0], [1], [0, 0, 1, 1], [], []>} : vector<8x128xf32>, vector<128x128xf32>, vector<8x128xf32> -> vector<8x128xf32>
      %c0_17 = arith.constant 0 : index
      %c0_18 = arith.constant 0 : index
      %28 = vector.load %arg5[%c0_17, %c0_18] : memref<1x128xf32, #tpu.memory_space<vmem>>, vector<1x128xf32>
      %29 = vector.broadcast %28 : vector<1x128xf32> to vector<8x128xf32>
      %30 = arith.addf %27, %29 : vector<8x128xf32>
      %c0_19 = arith.constant 0 : index
      %c0_20 = arith.constant 0 : index
      %31 = vector.load %arg6[%c0_19, %c0_20] : memref<8x128xf32, #tpu.memory_space<vmem>>, vector<8x128xf32>
      tpu.vector_store %arg6[%c0_19, %c0_20], %30 {strides = array<i32>} : memref<8x128xf32, #tpu.memory_space<vmem>>, vector<8x128xf32>,
    } else {
    }
    return
  }
  func.func @transform_0(%arg0: i32, %arg1: i32) -> (i32, i32) {
    %c0_i32 = arith.constant 0 : i32
    %c0_i32_0 = arith.constant 0 : i32
    return %arg0, %c0_i32 : i32, i32
  }
  func.func @transform_1(%arg0: i32, %arg1: i32) -> (i32, i32) {
    %c0_i32 = arith.constant 0 : i32
    %c0_i32_0 = arith.constant 0 : i32
    return %arg1, %c0_i32 : i32, i32
  }
  func.func @transform_2(%arg0: i32, %arg1: i32) -> (i32, i32) {
    %c0_i32 = arith.constant 0 : i32
    %c0_i32_0 = arith.constant 0 : i32
    %c0_i32_1 = arith.constant 0 : i32
    return %c0_i32, %c0_i32_0 : i32, i32
  }
  func.func @transform_3(%arg0: i32, %arg1: i32) -> (i32, i32) {
    %c0_i32 = arith.constant 0 : i32
    %c0_i32_0 = arith.constant 0 : i32
    %c0_i32_1 = arith.constant 0 : i32
    return %c0_i32, %c0_i32_0 : i32, i32
  }
  func.func @transform_4(%arg0: i32, %arg1: i32) -> (i32, i32) {
    %c0_i32 = arith.constant 0 : i32
    %c0_i32_0 = arith.constant 0 : i32
    return %arg0, %c0_i32 : i32, i32
  }
}

</mosaic_0001>

<llo_original>
// kernel: tpu_custom_call.1
$region0: #{tpu_custom_call.1}
  #allocation0 [shape = 'u32[]', space=smem, size = 0x4, offset = 0x4, fixed_abs, tag = 'smem constant byte address 0x4 - core index']
  #allocation1 [shape = 'u32[144,128]{1,0:T(1,128)}', space=vmem, size = 0x12000, scoped, tag = 'internal scratch']
  #allocation2 [shape = 'f32[8,128]{1,0:T(8,128)}', space=vmem, size = 0x1000, scoped, tag = 'scratch operand']
  %s0 = inlined_call_operand.hbm [shape: s32[8,8], index: 0, kind: input, shape index: {}]
  %s1 = inlined_call_operand.hbm [shape: bf16[128,128], index: 1, kind: input, shape index: {}]
  %s2 = inlined_call_operand.hbm [shape: f32[128,128], index: 2, kind: input, shape index: {}]
  %s3 = inlined_call_operand.vmem [shape: f32[1,128], index: 3, kind: input, shape index: {}]
  %s4 = inlined_call_operand.hbm [shape: f32[8,128], index: 4, kind: output, shape index: {}]
  %s5 = sld [smem:[#allocation0]]
  $region46: #{tpu_custom_call.1} parent=0
    _
  %s7 = ssub.s32 1, %s5
  %s8 = scalar_select 0, %s7, %s5
  $region1: #{tpu_custom_call.1} parent=0
    #allocation3 [shape = 'u8[4096]{0}', space=vmem, size = 0x1000, scoped, tag = 'input window, operand 0, single buffered']
    #allocation4 [shape = 's32[1]{0}', space=sflag, size = 0x4, scoped, tag = 'scoped memory for tpu_custom_call.1']
    #allocation5 [shape = 's32[1]{0}', space=sflag, size = 0x4, scoped, tag = 'scoped memory for tpu_custom_call.1']
    #allocation6 [shape = 'u8[32768]{0}', space=vmem, size = 0x8000, scoped, tag = 'input window, operand 1, single buffered']
    #allocation7 [shape = 's32[1]{0}', space=sflag, size = 0x4, scoped, tag = 'scoped memory for tpu_custom_call.1']
    #allocation8 [shape = 'u8[65536]{0}', space=vmem, size = 0x10000, scoped, tag = 'input window, operand 2, single buffered']
    #allocation9 [shape = 'u8[4096]{0}', space=vmem, size = 0x1000, scoped, tag = 'output window, operand 0, single buffered']
    %9 = vsyncpa [#allocation4], 0
    %10 = vsyncpa [#allocation7], 0
    %11 = vsyncpa [#allocation5], 0
    // Predicated region
    $region2: #{tpu_custom_call.1} parent=1 // pred_check
      _
    $region3: #{tpu_custom_call.1} parent=1 // pred_check_branch
      %13 = sbr.rel (0) target = $region5
    $region4: #{tpu_custom_call.1} parent=1 // pred_region
      %s15 = ssub.s32 128, 128
      %16 = vsyncadd [#allocation4], %s15
      %s18 = sshll.u32 [#allocation3], 4
      %s19 = int_to_ptr.vmem [resolvable:$true] %s18
      %21 = dma.hbm_to_vmem [thread:$0]  %s0, 128, %s19, [#allocation4]
    $region5: #{tpu_custom_call.1} parent=1 // pred_fallthru
      _
    // Predicated region
    $region6: #{tpu_custom_call.1} parent=1 // pred_check
      _
    $region7: #{tpu_custom_call.1} parent=1 // pred_check_branch
      %23 = sbr.rel (0) target = $region9
    $region8: #{tpu_custom_call.1} parent=1 // pred_region
      %s25 = ssub.s32 1024, 1024
      %26 = vsyncadd [#allocation7], %s25
      %s27 = sshll.u32 [#allocation6], 4
      %s28 = int_to_ptr.vmem [resolvable:$true] %s27
      %33 = dma.hbm_to_vmem [thread:$0]  %s1, 1024, %s28, [#allocation7], 64, 64, 4
    $region9: #{tpu_custom_call.1} parent=1 // pred_fallthru
      _
    // Predicated region
    $region10: #{tpu_custom_call.1} parent=1 // pred_check
      _
    $region11: #{tpu_custom_call.1} parent=1 // pred_check_branch
      %35 = sbr.rel (0) target = $region13
    $region12: #{tpu_custom_call.1} parent=1 // pred_region
      %s37 = ssub.s32 2048, 2048
      %38 = vsyncadd [#allocation7], %s37
      %s39 = sshll.u32 [#allocation8], 4
      %s40 = int_to_ptr.vmem [resolvable:$true] %s39
      %45 = dma.hbm_to_vmem [thread:$0]  %s2, 2048, %s40, [#allocation7], 128, 128, 8
    $region13: #{tpu_custom_call.1} parent=1 // pred_fallthru
      _
    // Predicated region
    $region14: #{tpu_custom_call.1} parent=1 // pred_check
      _
    $region15: #{tpu_custom_call.1} parent=1 // pred_check_branch
      %47 = sbr.rel (0) target = $region17
    $region16: #{tpu_custom_call.1} parent=1 // pred_region
      _
    $region17: #{tpu_custom_call.1} parent=1 // pred_fallthru
      _
    // Predicated region
    $region18: #{tpu_custom_call.1} parent=1 // pred_check
      _
    $region19: #{tpu_custom_call.1} parent=1 // pred_check_branch
      %49 = sbr.rel (0) target = $region21
    $region20: #{tpu_custom_call.1} parent=1 // pred_region
      %50 = dma.done [#allocation4], 128
    $region21: #{tpu_custom_call.1} parent=1 // pred_fallthru
      _
    // Predicated region
    $region22: #{tpu_custom_call.1} parent=1 // pred_check
      _
    $region23: #{tpu_custom_call.1} parent=1 // pred_check_branch
      %52 = sbr.rel (0) target = $region25
    $region24: #{tpu_custom_call.1} parent=1 // pred_region
      %53 = dma.done [#allocation7], 1024
    $region25: #{tpu_custom_call.1} parent=1 // pred_fallthru
      _
    // Predicated region
    $region26: #{tpu_custom_call.1} parent=1 // pred_check
      _
    $region27: #{tpu_custom_call.1} parent=1 // pred_check_branch
      %55 = sbr.rel (0) target = $region29
    $region28: #{tpu_custom_call.1} parent=1 // pred_region
      %56 = dma.done [#allocation7], 2048
    $region29: #{tpu_custom_call.1} parent=1 // pred_fallthru
      _
    %p58 = scmp.eq.s32.totalorder 0, 0
    // Predicated region
    $region30: #{tpu_custom_call.1} parent=1 // pred_check
      %p59 = pneg %p58
    $region31: #{tpu_custom_call.1} parent=1 // pred_check_branch
      %61 = sbr.rel (%p59) target = $region33
    $region32: #{tpu_custom_call.1} parent=1 // pred_region
      %62 = vst [vmem:[#allocation2] sm:$0xff] 0.0
    $region33: #{tpu_custom_call.1} parent=1 // pred_fallthru
      _
    %v63 = vld [vmem:[#allocation3] sm:$0xff]
    %v64 = vlaneseq
    %v65 = vand.u32 %v64, 127
    %s66 = smul.u32 0, 128
    %v67 = vstv %s66
    %v68 = vadd.s32 %v65, %v67
    %v69 = vlaneseq
    %v70 = vshrl.u32 %v69, 7
    %v71 = vsub.s32 0, %v70
    %v72 = vrot.slane %v63, %v71
    %74 = vbcast.lane.b32.xlu0 %v72, 256
    %v75 = vpop.permute.xlu0 %74
    %v76 = vlaneseq
    %v77 = vshrl.u32 %v76, 7
    %v78 = vsub.s32 1, %v77
    %v79 = vrot.slane %v63, %v78
    %81 = vbcast.lane.b32.xlu0 %v79, 256
    %v82 = vpop.permute.xlu0 %81
    %v83 = vlaneseq
    %v84 = vshrl.u32 %v83, 7
    %v85 = vsub.s32 2, %v84
    %v86 = vrot.slane %v63, %v85
    %88 = vbcast.lane.b32.xlu0 %v86, 256
    %v89 = vpop.permute.xlu0 %88
    %v90 = vlaneseq
    %v91 = vshrl.u32 %v90, 7
    %v92 = vsub.s32 3, %v91
    %v93 = vrot.slane %v63, %v92
    %95 = vbcast.lane.b32.xlu0 %v93, 256
    %v96 = vpop.permute.xlu0 %95
    %v97 = vlaneseq
    %v98 = vshrl.u32 %v97, 7
    %v99 = vsub.s32 4, %v98
    %v100 = vrot.slane %v63, %v99
    %102 = vbcast.lane.b32.xlu0 %v100, 256
    %v103 = vpop.permute.xlu0 %102
    %v104 = vlaneseq
    %v105 = vshrl.u32 %v104, 7
    %v106 = vsub.s32 5, %v105
    %v107 = vrot.slane %v63, %v106
    %109 = vbcast.lane.b32.xlu0 %v107, 256
    %v110 = vpop.permute.xlu0 %109
    %v111 = vlaneseq
    %v112 = vshrl.u32 %v111, 7
    %v113 = vsub.s32 6, %v112
    %v114 = vrot.slane %v63, %v113
    %116 = vbcast.lane.b32.xlu0 %v114, 256
    %v117 = vpop.permute.xlu0 %116
    %v118 = vlaneseq
    %v119 = vshrl.u32 %v118, 7
    %v120 = vsub.s32 7, %v119
    %v121 = vrot.slane %v63, %v120
    %123 = vbcast.lane.b32.xlu0 %v121, 256
    %v124 = vpop.permute.xlu0 %123
    %vm125 = vcmp.eq.s32.totalorder %v75, %v68
    %vm126 = vcmp.eq.s32.totalorder %v82, %v68
    %vm127 = vcmp.eq.s32.totalorder %v89, %v68
    %vm128 = vcmp.eq.s32.totalorder %v96, %v68
    %vm129 = vcmp.eq.s32.totalorder %v103, %v68
    %vm130 = vcmp.eq.s32.totalorder %v110, %v68
    %vm131 = vcmp.eq.s32.totalorder %v117, %v68
    %vm132 = vcmp.eq.s32.totalorder %v124, %v68
    %v133 = vsel %vm125, 1, 0
    %v134 = vsel %vm126, 1, 0
    %v135 = vsel %vm127, 1, 0
    %v136 = vsel %vm128, 1, 0
    %v137 = vsel %vm129, 1, 0
    %v138 = vsel %vm130, 1, 0
    %v139 = vsel %vm131, 1, 0
    %v140 = vsel %vm132, 1, 0
    %v141 = vcvt.s32.f32 %v133
    %v142 = vcvt.s32.f32 %v134
    %v143 = vcvt.s32.f32 %v135
    %v144 = vcvt.s32.f32 %v136
    %v145 = vcvt.s32.f32 %v137
    %v146 = vcvt.s32.f32 %v138
    %v147 = vcvt.s32.f32 %v139
    %v148 = vcvt.s32.f32 %v140
    %v149 = vrot.slane %v141, 4
    %v150 = vadd.f32 %v141, %v149
    %v151 = vrot.slane %v150, 2
    %v152 = vadd.f32 %v150, %v151
    %v153 = vrot.slane %v152, 1
    %v154 = vadd.f32 %v152, %v153
    %v155 = vrot.slane %v142, 4
    %v156 = vadd.f32 %v142, %v155
    %v157 = vrot.slane %v156, 2
    %v158 = vadd.f32 %v156, %v157
    %v159 = vrot.slane %v158, 1
    %v160 = vadd.f32 %v158, %v159
    %v161 = vrot.slane %v143, 4
    %v162 = vadd.f32 %v143, %v161
    %v163 = vrot.slane %v162, 2
    %v164 = vadd.f32 %v162, %v163
    %v165 = vrot.slane %v164, 1
    %v166 = vadd.f32 %v164, %v165
    %v167 = vrot.slane %v144, 4
    %v168 = vadd.f32 %v144, %v167
    %v169 = vrot.slane %v168, 2
    %v170 = vadd.f32 %v168, %v169
    %v171 = vrot.slane %v170, 1
    %v172 = vadd.f32 %v170, %v171
    %v173 = vrot.slane %v145, 4
    %v174 = vadd.f32 %v145, %v173
    %v175 = vrot.slane %v174, 2
    %v176 = vadd.f32 %v174, %v175
    %v177 = vrot.slane %v176, 1
    %v178 = vadd.f32 %v176, %v177
    %v179 = vrot.slane %v146, 4
    %v180 = vadd.f32 %v146, %v179
    %v181 = vrot.slane %v180, 2
    %v182 = vadd.f32 %v180, %v181
    %v183 = vrot.slane %v182, 1
    %v184 = vadd.f32 %v182, %v183
    %v185 = vrot.slane %v147, 4
    %v186 = vadd.f32 %v147, %v185
    %v187 = vrot.slane %v186, 2
    %v188 = vadd.f32 %v186, %v187
    %v189 = vrot.slane %v188, 1
    %v190 = vadd.f32 %v188, %v189
    %v191 = vrot.slane %v148, 4
    %v192 = vadd.f32 %v148, %v191
    %v193 = vrot.slane %v192, 2
    %v194 = vadd.f32 %v192, %v193
    %v195 = vrot.slane %v194, 1
    %v196 = vadd.f32 %v194, %v195
    %v197 = vmul.f32 %v154, 0.125
    %v198 = vmul.f32 %v160, 0.125
    %v199 = vmul.f32 %v166, 0.125
    %v200 = vmul.f32 %v172, 0.125
    %v201 = vmul.f32 %v178, 0.125
    %v202 = vmul.f32 %v184, 0.125
    %v203 = vmul.f32 %v190, 0.125
    %v204 = vmul.f32 %v196, 0.125
    %v205 = vld [vmem:[#allocation2] sm:$0xff]
    %v206 = vpack.c.bf16 %v197, %v197
    %v207 = vpack.c.bf16 %v198, %v198
    %v208 = vpack.c.bf16 %v199, %v199
    %v209 = vpack.c.bf16 %v200, %v200
    %v210 = vpack.c.bf16 %v201, %v201
    %v211 = vpack.c.bf16 %v202, %v202
    %v212 = vpack.c.bf16 %v203, %v203
    %v213 = vpack.c.bf16 %v204, %v204
    %v214 = vld [vmem:[#allocation6] sm:$0xf]
    %v215 = vld [vmem:[#allocation6 + $0x4] sm:$0xf]
    %v216 = vld [vmem:[#allocation6 + $0x8] sm:$0xf]
    %v217 = vld [vmem:[#allocation6 + $0xc] sm:$0xf]
    %v218 = vld [vmem:[#allocation6 + $0x10] sm:$0xf]
    %v219 = vld [vmem:[#allocation6 + $0x14] sm:$0xf]
    %v220 = vld [vmem:[#allocation6 + $0x18] sm:$0xf]
    %v221 = vld [vmem:[#allocation6 + $0x1c] sm:$0xf]
    %v222 = vld [vmem:[#allocation6 + $0x20] sm:$0xf]
    %v223 = vld [vmem:[#allocation6 + $0x24] sm:$0xf]
    %v224 = vld [vmem:[#allocation6 + $0x28] sm:$0xf]
    %v225 = vld [vmem:[#allocation6 + $0x2c] sm:$0xf]
    %v226 = vld [vmem:[#allocation6 + $0x30] sm:$0xf]
    %v227 = vld [vmem:[#allocation6 + $0x34] sm:$0xf]
    %v228 = vld [vmem:[#allocation6 + $0x38] sm:$0xf]
    %v229 = vld [vmem:[#allocation6 + $0x3c] sm:$0xf]
    %v238 = vunpack.c.l.b16 %v206
    %v239 = vunpack.c.l.b16 %v207
    %v240 = vunpack.c.l.b16 %v208
    %v241 = vunpack.c.l.b16 %v209
    %v242 = vunpack.c.l.b16 %v210
    %v243 = vunpack.c.l.b16 %v211
    %v244 = vunpack.c.l.b16 %v212
    %v245 = vunpack.c.l.b16 %v213
    %vm246 = vcmask 1041409
    %v247 = vsel %vm246, %v239, %v238
    %vm248 = vcmask 1042434
    %v249 = vsel %vm248, %v240, %v247
    %vm250 = vcmask 1043459
    %v251 = vsel %vm250, %v241, %v249
    %vm252 = vcmask 1044484
    %v253 = vsel %vm252, %v242, %v251
    %vm254 = vcmask 1045509
    %v255 = vsel %vm254, %v243, %v253
    %vm256 = vcmask 1046534
    %v257 = vsel %vm256, %v244, %v255
    %vm258 = vcmask 1047559
    %v259 = vsel %vm258, %v245, %v257
    %v260 = vpack.c.b16 %v259, %v259
    %v278 = vunpack.c.l.b16 %v214
    %v279 = vunpack.c.l.b16 %v215
    %v280 = vunpack.c.l.b16 %v216
    %v281 = vunpack.c.l.b16 %v217
    %v282 = vunpack.c.l.b16 %v218
    %v283 = vunpack.c.l.b16 %v219
    %v284 = vunpack.c.l.b16 %v220
    %v285 = vunpack.c.l.b16 %v221
    %v286 = vunpack.c.l.b16 %v222
    %v287 = vunpack.c.l.b16 %v223
    %v288 = vunpack.c.l.b16 %v224
    %v289 = vunpack.c.l.b16 %v225
    %v290 = vunpack.c.l.b16 %v226
    %v291 = vunpack.c.l.b16 %v227
    %v292 = vunpack.c.l.b16 %v228
    %v293 = vunpack.c.l.b16 %v229
    %v294 = vpack.c.b16 %v279, %v278
    %v295 = vpack.c.b16 %v281, %v280
    %v296 = vpack.c.b16 %v283, %v282
    %v297 = vpack.c.b16 %v285, %v284
    %v298 = vpack.c.b16 %v287, %v286
    %v299 = vpack.c.b16 %v289, %v288
    %v300 = vpack.c.b16 %v291, %v290
    %v301 = vpack.c.b16 %v293, %v292
    %310 = vmatprep.subr.bf16.mxu0 0
    %311 = vmatpush1.bf16.msra.mxu0 %v301
    %312 = vmatprep.subr.bf16.mxu0 0
    %313 = vmatpush1.bf16.msra.mxu0 %v300
    %314 = vmatprep.subr.bf16.mxu0 0
    %315 = vmatpush1.bf16.msra.mxu0 %v299
    %316 = vmatprep.subr.bf16.mxu0 0
    %317 = vmatpush1.bf16.msra.mxu0 %v298
    %318 = vmatprep.subr.bf16.mxu0 0
    %319 = vmatpush1.bf16.msra.mxu0 %v297
    %320 = vmatprep.subr.bf16.mxu0 0
    %321 = vmatpush1.bf16.msra.mxu0 %v296
    %322 = vmatprep.subr.bf16.mxu0 0
    %323 = vmatpush1.bf16.msra.mxu0 %v295
    %324 = vmatprep.subr.bf16.mxu0 0
    %325 = vmatpush1.bf16.msra.mxu0 %v294
    %326 = vmatprep.subr.bf16.mxu0 0
    %327 = vmatpush2.bf16.msra.mxu0 0
    %328 = vmatprep.subr.bf16.mxu0 0
    %329 = vmatpush2.bf16.msra.mxu0 0
    %330 = vmatprep.subr.bf16.mxu0 0
    %331 = vmatpush2.bf16.msra.mxu0 0
    %332 = vmatprep.subr.bf16.mxu0 0
    %333 = vmatpush2.bf16.msra.mxu0 0
    %334 = vmatprep.subr.bf16.mxu0 0
    %335 = vmatpush2.bf16.msra.mxu0 0
    %336 = vmatprep.subr.bf16.mxu0 0
    %337 = vmatpush2.bf16.msra.mxu0 0
    %338 = vmatprep.subr.bf16.mxu0 0
    %339 = vmatpush2.bf16.msra.mxu0 0
    %340 = vmatprep.subr.bf16.mxu0 0
    %341 = vmatpush2.bf16.msra.mxu0 0
    %342 = vmatprep.mubr.bf16.mxu0 0
    %343 = vmatmul.mubr.bf16.gmra.mxu0 %v260
    %v344 = vpop.f32.mrf.mxu0
    %v345 = vadd.f32 0.0, %v344
    %v346 = vpop.f32.mrf.mxu0
    %v347 = vpop.f32.mrf.mxu0
    %v348 = vpop.f32.mrf.mxu0
    %349 = vdwg.mxu0
    %v350 = vadd.f32 %v205, %v345
    %351 = vst [vmem:[#allocation2] sm:$0xff] %v350
    // Predicated region
    $region34: #{tpu_custom_call.1} parent=1 // pred_check
      %p352 = pneg %p58
    $region35: #{tpu_custom_call.1} parent=1 // pred_check_branch
      %354 = sbr.rel (%p352) target = $region37
    $region36: #{tpu_custom_call.1} parent=1 // pred_region
      %v355 = vld [vmem:[#allocation2] sm:$0xff]
      %v356 = vld [vmem:[#allocation8] sm:$0xff]
      %v357 = vld [vmem:[#allocation8 + $0x8] sm:$0xff]
      %v358 = vld [vmem:[#allocation8 + $0x10] sm:$0xff]
      %v359 = vld [vmem:[#allocation8 + $0x18] sm:$0xff]
      %v360 = vld [vmem:[#allocation8 + $0x20] sm:$0xff]
      %v361 = vld [vmem:[#allocation8 + $0x28] sm:$0xff]
      %v362 = vld [vmem:[#allocation8 + $0x30] sm:$0xff]
      %v363 = vld [vmem:[#allocation8 + $0x38] sm:$0xff]
      %v364 = vld [vmem:[#allocation8 + $0x40] sm:$0xff]
      %v365 = vld [vmem:[#allocation8 + $0x48] sm:$0xff]
      %v366 = vld [vmem:[#allocation8 + $0x50] sm:$0xff]
      %v367 = vld [vmem:[#allocation8 + $0x58] sm:$0xff]
      %v368 = vld [vmem:[#allocation8 + $0x60] sm:$0xff]
      %v369 = vld [vmem:[#allocation8 + $0x68] sm:$0xff]
      %v370 = vld [vmem:[#allocation8 + $0x70] sm:$0xff]
      %v371 = vld [vmem:[#allocation8 + $0x78] sm:$0xff]
      %v372 = vld [vmem:[%s3] sm:$0x1]
      %v374 = vlaneseq
      %v375 = vshrl.u32 %v374, 7
      %v376 = vsub.s32 0, %v375
      %v377 = vrot.slane %v372, %v376
      %379 = vmatprep.subr.mxu0 0.0
      %380 = vmatpush1.msra.mxu0 %v371
      %381 = vmatprep.subr.mxu0 0.0
      %382 = vmatpush1.msra.mxu0 %v370
      %383 = vmatprep.subr.mxu0 0.0
      %384 = vmatpush1.msra.mxu0 %v369
      %385 = vmatprep.subr.mxu0 0.0
      %386 = vmatpush1.msra.mxu0 %v368
      %387 = vmatprep.subr.mxu0 0.0
      %388 = vmatpush1.msra.mxu0 %v367
      %389 = vmatprep.subr.mxu0 0.0
      %390 = vmatpush1.msra.mxu0 %v366
      %391 = vmatprep.subr.mxu0 0.0
      %392 = vmatpush1.msra.mxu0 %v365
      %393 = vmatprep.subr.mxu0 0.0
      %394 = vmatpush1.msra.mxu0 %v364
      %395 = vmatprep.subr.mxu0 0.0
      %396 = vmatpush1.msra.mxu0 %v363
      %397 = vmatprep.subr.mxu0 0.0
      %398 = vmatpush1.msra.mxu0 %v362
      %399 = vmatprep.subr.mxu0 0.0
      %400 = vmatpush1.msra.mxu0 %v361
      %401 = vmatprep.subr.mxu0 0.0
      %402 = vmatpush1.msra.mxu0 %v360
      %403 = vmatprep.subr.mxu0 0.0
      %404 = vmatpush1.msra.mxu0 %v359
      %405 = vmatprep.subr.mxu0 0.0
      %406 = vmatpush1.msra.mxu0 %v358
      %407 = vmatprep.subr.mxu0 0.0
      %408 = vmatpush1.msra.mxu0 %v357
      %409 = vmatprep.subr.mxu0 0.0
      %410 = vmatpush1.msra.mxu0 %v356
      %411 = vmatprep.subr.mxu0 0.0
      %412 = vmatpush2.msra.mxu0 0.0
      %413 = vmatprep.subr.mxu0 0.0
      %414 = vmatpush2.msra.mxu0 0.0
      %415 = vmatprep.subr.mxu0 0.0
      %416 = vmatpush2.msra.mxu0 0.0
      %417 = vmatprep.subr.mxu0 0.0
      %418 = vmatpush2.msra.mxu0 0.0
      %419 = vmatprep.subr.mxu0 0.0
      %420 = vmatpush2.msra.mxu0 0.0
      %421 = vmatprep.subr.mxu0 0.0
      %422 = vmatpush2.msra.mxu0 0.0
      %423 = vmatprep.subr.mxu0 0.0
      %424 = vmatpush2.msra.mxu0 0.0
      %425 = vmatprep.subr.mxu0 0.0
      %426 = vmatpush2.msra.mxu0 0.0
      %427 = vmatprep.subr.mxu0 0.0
      %428 = vmatpush2.msra.mxu0 0.0
      %429 = vmatprep.subr.mxu0 0.0
      %430 = vmatpush2.msra.mxu0 0.0
      %431 = vmatprep.subr.mxu0 0.0
      %432 = vmatpush2.msra.mxu0 0.0
      %433 = vmatprep.subr.mxu0 0.0
      %434 = vmatpush2.msra.mxu0 0.0
      %435 = vmatprep.subr.mxu0 0.0
      %436 = vmatpush2.msra.mxu0 0.0
      %437 = vmatprep.subr.mxu0 0.0
      %438 = vmatpush2.msra.mxu0 0.0
      %439 = vmatprep.subr.mxu0 0.0
      %440 = vmatpush2.msra.mxu0 0.0
      %441 = vmatprep.subr.mxu0 0.0
      %442 = vmatpush2.msra.mxu0 0.0
      %443 = vmatprep.mubr.f32.mxu0 0.0
      %444 = vmatmul.mubr.f32.gmra.mxu0 %v355
      %v445 = vpop.f32.mrf.mxu0
      %v446 = vadd.f32 %v377, %v445
      %v447 = vpop.f32.mrf.mxu0
      %448 = vdwg.mxu0
      %449 = vst [vmem:[#allocation9] sm:$0xff] %v446
    $region37: #{tpu_custom_call.1} parent=1 // pred_fallthru
      _
    // Predicated region
    $region38: #{tpu_custom_call.1} parent=1 // pred_check
      _
    $region39: #{tpu_custom_call.1} parent=1 // pred_check_branch
      %451 = sbr.rel (0) target = $region41
    $region40: #{tpu_custom_call.1} parent=1 // pred_region
      %s453 = ssub.s32 128, 128
      %454 = vsyncadd [#allocation5], %s453
      %s456 = sshll.u32 [#allocation9], 4
      %s457 = int_to_ptr.vmem [resolvable:$true] %s456
      %459 = dma.vmem_to_hbm [thread:$0]  %s457, 128, %s4, [#allocation5]
    $region41: #{tpu_custom_call.1} parent=1 // pred_fallthru
      _
    // Predicated region
    $region42: #{tpu_custom_call.1} parent=1 // pred_check
      _
    $region43: #{tpu_custom_call.1} parent=1 // pred_check_branch
      %461 = sbr.rel (0) target = $region45
    $region44: #{tpu_custom_call.1} parent=1 // pred_region
      %462 = dma.done [#allocation5], 128
    $region45: #{tpu_custom_call.1} parent=1 // pred_fallthru
      _
    %463 = vsyncpa [#allocation4], 1
    %464 = vsyncpa [#allocation7], 1
    %465 = vsyncpa [#allocation5], 1

</llo_original>
